<compile_context>
chip_gen: v7x
topology: tpu7x:2x2x1
jax: 0.10.0
libtpu: 0.0.40
codegen_flags: <defaults>
</compile_context>

<pallas_src>
import math

import jax
import jax.numpy as jnp
from jax.experimental import pallas as pl
from jax.experimental.pallas import tpu as pltpu

_SQRT_2_OVER_PI = math.sqrt(2.0 / math.pi)
_C1 = _SQRT_2_OVER_PI * 0.044715          # pre-folded: sqrt(2/pi) * 0.044715

_LANES = 128
# ~2 MiB per block: measured elementwise data shows >=85% of HBM roofline at
# this size; 2(in) + 2(out) double-buffers ~= 8 MiB total, safe on all gens.
_TARGET_TILE_BYTES = 2 * 1024 * 1024


def _gelu_kernel(x_ref, o_ref):
    # Upcast to f32 for the polynomial + tanh (no-op for f32 inputs; for bf16
    # it avoids the missing bf16 VPU/EUP path on v5e and improves parity with
    # the PyTorch reference), cast back on store.
    x = x_ref[...].astype(jnp.float32)
    x2 = x * x
    # inner = sqrt(2/pi) * (x + 0.044715 * x^3), with constants pre-folded so
    # only two vmuls + one vadd feed the single tanh (EUP) per element.
    inner = x * (_SQRT_2_OVER_PI + _C1 * x2)
    o_ref[...] = (0.5 * x * (1.0 + jnp.tanh(inner))).astype(o_ref.dtype)


def gelu(x: jax.Array) -> jax.Array:
    """Tanh-approx GELU matching the PyTorch reference semantics exactly."""
    orig_shape = x.shape
    orig_dtype = x.dtype
    n = x.size
    if n == 0:
        return x

    flat = x.reshape(-1)

    # Pad only when the element count is not 128-aligned.  gelu(0) == 0 and the
    # padded tail is sliced off, so zero padding is numerically safe.
    padded_len = pl.cdiv(n, _LANES) * _LANES
    needs_pad = padded_len != n
    if needs_pad:
        flat = jnp.pad(flat, (0, padded_len - n))

    # Lane-dense slab: widest W (multiple of 128) dividing padded_len, so all
    # stores are full unmasked vst and blocks are as wide as possible.
    W = _LANES
    for cand in (2048, 1024, 512, 256):
        if padded_len % cand == 0:
            W = cand
            break
    rows = padded_len // W
    x2d = flat.reshape(rows, W)

    itemsize = jnp.dtype(orig_dtype).itemsize
    rows_per_tile = max(1, _TARGET_TILE_BYTES // (W * itemsize))
    if rows <= rows_per_tile:
        block_rows = rows                           # one block spans the rows axis
    else:
        block_rows = max(8, (rows_per_tile // 8) * 8)   # sublane-aligned (8)

    grid = (pl.cdiv(rows, block_rows),)             # ragged last block is fine

    out2d = pl.pallas_call(
        _gelu_kernel,
        out_shape=jax.ShapeDtypeStruct((rows, W), orig_dtype),
        grid_spec=pltpu.PrefetchScalarGridSpec(
            num_scalar_prefetch=0,
            grid=grid,
            in_specs=[pl.BlockSpec((block_rows, W), lambda i: (i, 0))],
            out_specs=pl.BlockSpec((block_rows, W), lambda i: (i, 0)),
        ),
        compiler_params=pltpu.CompilerParams(
            # parallel grid axis -> shards across both TensorCores on v7x.
            dimension_semantics=("parallel",),
            # Explicit budget: comfortably holds the ~8 MiB of double-buffered
            # tiles on every generation (v5e default is only 16 MiB).
            vmem_limit_bytes=32 * 1024 * 1024,
        ),
    )(x2d)

    out_flat = out2d.reshape(-1)
    if needs_pad:
        out_flat = out_flat[:n]
    return out_flat.reshape(orig_shape)


def _gelu_ref(x):
    # Pure-JAX reference mirroring the PyTorch formula.
    c = math.sqrt(2.0 / math.pi)
    return 0.5 * x * (1.0 + jnp.tanh(c * (x + 0.044715 * jnp.power(x, 3))))


if __name__ == "__main__":
    key = jax.random.PRNGKey(0)

    # Small transformer-activation-like shape: (batch, seq, hidden); hidden a
    # multiple of 128 elements overall -> exercises the no-pad fast path.
    x1 = jax.random.normal(key, (2, 8, 32), dtype=jnp.float32)
    out1 = gelu(x1)
    jax.block_until_ready(out1)
    assert out1.shape == x1.shape and out1.dtype == x1.dtype
    assert jnp.allclose(out1, _gelu_ref(x1), atol=1e-5, rtol=1e-5)

    # Non-128-aligned shape -> exercises the pad + slice path.
    x2 = jax.random.normal(jax.random.PRNGKey(1), (3, 5, 7), dtype=jnp.float32)
    out2 = gelu(x2)
    jax.block_until_ready(out2)
    assert out2.shape == x2.shape and out2.dtype == x2.dtype
    assert jnp.allclose(out2, _gelu_ref(x2), atol=1e-5, rtol=1e-5)

    print("KERNEL_OK")
</pallas_src>

<mosaic_0001>
module attributes {stable_mosaic.version = 11 : i64} {
  func.func @_gelu_kernel(%arg0: i32, %arg1: memref<1x512xf32, #tpu.memory_space<vmem>>, %arg2: memref<1x512xf32, #tpu.memory_space<vmem>>) attributes {dimension_semantics = [#tpu.dimension_semantics<parallel>], iteration_bounds = array<i64: 1>, scalar_prefetch = 0 : i64, scratch_operands = 0 : i64, tpu.core_type = #tpu.core_type<tc>, window_params = [{transform_indices = @transform_0, window_bounds = array<i64: 1, 512>}, {transform_indices = @transform_1, window_bounds = array<i64: 1, 512>}]} {
    %c0 = arith.constant 0 : index
    %c0_0 = arith.constant 0 : index
    %0 = vector.load %arg1[%c0, %c0_0] : memref<1x512xf32, #tpu.memory_space<vmem>>, vector<1x512xf32>
    %1 = arith.mulf %0, %0 : vector<1x512xf32>
    %cst = arith.constant 0.0356774069 : f32
    %2 = vector.broadcast %cst : f32 to vector<1x512xf32>
    %3 = arith.mulf %2, %1 : vector<1x512xf32>
    %cst_1 = arith.constant 0.797884583 : f32
    %4 = vector.broadcast %cst_1 : f32 to vector<1x512xf32>
    %5 = arith.addf %4, %3 : vector<1x512xf32>
    %6 = arith.mulf %0, %5 : vector<1x512xf32>
    %cst_2 = arith.constant 5.000000e-01 : f32
    %7 = vector.broadcast %cst_2 : f32 to vector<1x512xf32>
    %8 = arith.mulf %7, %0 : vector<1x512xf32>
    %9 = math.tanh %6 : vector<1x512xf32>
    %cst_3 = arith.constant 1.000000e+00 : f32
    %10 = vector.broadcast %cst_3 : f32 to vector<1x512xf32>
    %11 = arith.addf %10, %9 : vector<1x512xf32>
    %12 = arith.mulf %8, %11 : vector<1x512xf32>
    %c0_4 = arith.constant 0 : index
    %c0_5 = arith.constant 0 : index
    %13 = vector.load %arg2[%c0_4, %c0_5] : memref<1x512xf32, #tpu.memory_space<vmem>>, vector<1x512xf32>
    tpu.vector_store %arg2[%c0_4, %c0_5], %12 {strides = array<i32>} : memref<1x512xf32, #tpu.memory_space<vmem>>, vector<1x512xf32>,
    return
  }
  func.func @transform_0(%arg0: i32) -> (i32, i32) {
    %c0_i32 = arith.constant 0 : i32
    %c0_i32_0 = arith.constant 0 : i32
    return %arg0, %c0_i32 : i32, i32
  }
  func.func @transform_1(%arg0: i32) -> (i32, i32) {
    %c0_i32 = arith.constant 0 : i32
    %c0_i32_0 = arith.constant 0 : i32
    return %arg0, %c0_i32 : i32, i32
  }
}

</mosaic_0001>

<llo_original>
// kernel: tpu_custom_call.1
$region0: #{tpu_custom_call.1}
  #allocation0 [shape = 'u32[]', space=smem, size = 0x4, offset = 0x4, fixed_abs, tag = 'smem constant byte address 0x4 - core index']
  #allocation1 [shape = 'u32[144,128]{1,0:T(1,128)}', space=vmem, size = 0x12000, scoped, tag = 'internal scratch']
  %s0 = inlined_call_operand.hbm [shape: f32[1,512], index: 0, kind: input, shape index: {}]
  %s1 = inlined_call_operand.hbm [shape: f32[1,512], index: 1, kind: output, shape index: {}]
  %s2 = sld [smem:[#allocation0]]
  $region18: #{tpu_custom_call.1} parent=0
    _
  %s4 = ssub.s32 1, %s2
  %s5 = scalar_select 0, %s4, %s2
  $region1: #{tpu_custom_call.1} parent=0
    #allocation2 [shape = 'u8[2048]{0}', space=vmem, size = 0x800, scoped, tag = 'input window, operand 0, single buffered']
    #allocation3 [shape = 's32[1]{0}', space=sflag, size = 0x4, scoped, tag = 'scoped memory for tpu_custom_call.1']
    #allocation4 [shape = 's32[1]{0}', space=sflag, size = 0x4, scoped, tag = 'scoped memory for tpu_custom_call.1']
    #allocation5 [shape = 'u8[2048]{0}', space=vmem, size = 0x800, scoped, tag = 'output window, operand 0, single buffered']
    %6 = vsyncpa [#allocation3], 0
    %7 = vsyncpa [#allocation4], 0
    // Predicated region
    $region2: #{tpu_custom_call.1} parent=1 // pred_check
      _
    $region3: #{tpu_custom_call.1} parent=1 // pred_check_branch
      %9 = sbr.rel (0) target = $region5
    $region4: #{tpu_custom_call.1} parent=1 // pred_region
      %s11 = ssub.s32 64, 64
      %12 = vsyncadd [#allocation3], %s11
      %s14 = sshll.u32 [#allocation2], 4
      %s15 = int_to_ptr.vmem [resolvable:$true] %s14
      %17 = dma.hbm_to_vmem [thread:$0]  %s0, 64, %s15, [#allocation3]
    $region5: #{tpu_custom_call.1} parent=1 // pred_fallthru
      _
    // Predicated region
    $region6: #{tpu_custom_call.1} parent=1 // pred_check
      _
    $region7: #{tpu_custom_call.1} parent=1 // pred_check_branch
      %19 = sbr.rel (0) target = $region9
    $region8: #{tpu_custom_call.1} parent=1 // pred_region
      %20 = dma.done [#allocation3], 64
    $region9: #{tpu_custom_call.1} parent=1 // pred_fallthru
      _
    %v21 = vld [vmem:[#allocation2] sm:$0xf]
    %v22 = vmul.f32 %v21, %v21
    %v23 = vmul.f32 %v22, 0.035677407
    %v24 = vadd.f32 %v23, 0.7978846
    %v25 = vmul.f32 %v21, %v24
    %v26 = vmul.f32 %v21, 0.5
    %v27 = vtanh.pop %v25
    %v28 = vadd.f32 %v27, 1.0
    %v29 = vmul.f32 %v26, %v28
    %v30 = vlaneseq
    %vm31 = vcmp.ge.s32.totalorder %v30, 0
    %vm32 = vcmp.lt.s32.totalorder %v30, 512
    %vm33 = vmand %vm31, %vm32
    %34 = vst.msk [vmem:[#allocation5] sm:$0xf] %vm33, %v29
    // Predicated region
    $region10: #{tpu_custom_call.1} parent=1 // pred_check
      _
    $region11: #{tpu_custom_call.1} parent=1 // pred_check_branch
      %36 = sbr.rel (0) target = $region13
    $region12: #{tpu_custom_call.1} parent=1 // pred_region
      %s38 = ssub.s32 64, 64
      %39 = vsyncadd [#allocation4], %s38
      %s41 = sshll.u32 [#allocation5], 4
      %s42 = int_to_ptr.vmem [resolvable:$true] %s41
      %44 = dma.vmem_to_hbm [thread:$0]  %s42, 64, %s1, [#allocation4]
    $region13: #{tpu_custom_call.1} parent=1 // pred_fallthru
      _
    // Predicated region
    $region14: #{tpu_custom_call.1} parent=1 // pred_check
      _
    $region15: #{tpu_custom_call.1} parent=1 // pred_check_branch
      %46 = sbr.rel (0) target = $region17
    $region16: #{tpu_custom_call.1} parent=1 // pred_region
      %47 = dma.done [#allocation4], 64
    $region17: #{tpu_custom_call.1} parent=1 // pred_fallthru
      _
    %48 = vsyncpa [#allocation3], 1
    %49 = vsyncpa [#allocation4], 1

</llo_original>
